<compile_context>
chip_gen: v7x
topology: tpu7x:2x2x1
jax: 0.10.0
libtpu: 0.0.40
codegen_flags: <defaults>
</compile_context>

<pallas_src>
import jax
import jax.numpy as jnp
from jax import lax
from jax.experimental import pallas as pl
from jax.experimental.pallas import tpu as pltpu


def _round_up(x, m):
    return ((x + m - 1) // m) * m


def _spherical_kernel(x_ref, wt_ref, s_ref, st_ref, mu_ref, rho_ref):
    """One batch tile.

    x_ref:   (tile_n, C)     covariate tile (streamed)
    wt_ref:  (C, K*d)        pre-transposed Linear weight (constant block)
    s_ref:   (K*d, K)        0/1 cluster selector (constant block)
    st_ref:  (K, K*d)        its transpose (constant block)
    mu_ref:  (tile_n, K*d)   normalized embeddings, flat
    rho_ref: (tile_n, K)     concentrations
    """
    x = x_ref[...]
    wt = wt_ref[...]

    # Linear without bias: X @ W.T == X @ Wt (single MXU matmul, weight
    # transposed once in the wrapper).
    emb = jnp.dot(x, wt, preferred_element_type=jnp.float32)            # (tile_n, K*d)

    # Per-cluster squared norms via a 0/1 selector matmul on the MXU,
    # replacing K cross-lane XLU reductions and narrow masked stores.
    ss = jnp.dot(emb * emb, s_ref[...],
                 preferred_element_type=jnp.float32)                    # (tile_n, K)

    norms = jnp.sqrt(ss)          # EUP; zero norm -> 0 -> rho = 0 (matches torch)
    inv = lax.rsqrt(ss)           # EUP; zero norm -> inf -> mu NaN (matches torch)

    # rho = norms / (norms + 1) == 1 - 1/(norms + 1): EUP reciprocal + VPU sub.
    rho_ref[...] = 1.0 - pl.reciprocal(norms + 1.0, approx=False)

    # Broadcast 1/norm back over the d lanes of each cluster: inv @ S.T (MXU).
    inv_full = jnp.dot(inv, st_ref[...],
                       preferred_element_type=jnp.float32)              # (tile_n, K*d)
    mu_ref[...] = emb * inv_full                                        # one unmasked store


def _choose_tile_n(n, c, kd, k, *, budget_bytes=20 * 1024 * 1024, max_tile=1024):
    """Largest batch tile whose double-buffered f32 footprint fits the VMEM budget,
    while keeping >= 4 grid steps when N allows (>= 2 per TensorCore on v7x).

    Budget is conservative (20 MiB) so it fits under v7x's 32 MiB default scoped
    limit / 64 MiB physical VMEM as well as v5e/v6e; the tile-size perf curve
    saturates by 512-1024 rows anyway.
    """
    per_row = 2 * (c + kd + k) * 4                  # X, mu, rho tiles (x2 pipeline buffers)
    resident = 2 * (c * kd + 2 * kd * k) * 4        # Wt, S, S.T (default double-buffered)
    avail = max(budget_bytes - resident, 8 * per_row)
    tile = max(8, min(max_tile, avail // per_row) // 8 * 8)

    n_pad = _round_up(n, 8)
    tile = min(tile, n_pad)
    steps = pl.cdiv(n_pad, tile)
    if n_pad >= 4 * 8:
        steps = max(steps, 4)       # >= 2 iterations per TC on v7x -> DMA overlaps compute
    tile = min(max_tile, max(8, _round_up(pl.cdiv(n_pad, steps), 8)))
    return tile


def spherical_clustering_forward(X, W, *, num_clusters, response_dim, tile_n=None):
    """Pallas forward pass of SphericalClustering.

    X: (N, num_covariates) float32
    W: (num_clusters * response_dim, num_covariates) float32  (torch Linear weight)
    Returns (mu, rho) with shapes (N, K, d) and (N, K, 1).
    """
    N, C = X.shape
    K, d = num_clusters, response_dim
    Kd = K * d
    assert W.shape == (Kd, C)

    if tile_n is None:
        tile_n = _choose_tile_n(N, C, Kd, K)
    tile_n = max(8, _round_up(tile_n, 8))

    # Ragged trailing block handled by Pallas; no wrapper-side jnp.pad of X and
    # no post-kernel slicing of the outputs.
    grid = pl.cdiv(N, tile_n)

    Wt = W.T                                      # one-time wrapper-side transpose (XLA)

    # Static 0/1 selector: S[j, k] = 1 iff output column j belongs to cluster k.
    cluster_of_col = jnp.arange(Kd, dtype=jnp.int32) // d
    S = (cluster_of_col[:, None] ==
         jnp.arange(K, dtype=jnp.int32)[None, :]).astype(jnp.float32)    # (Kd, K)
    St = S.T                                                             # (K, Kd)

    mu_flat, rho = pl.pallas_call(
        _spherical_kernel,
        out_shape=(
            jax.ShapeDtypeStruct((N, Kd), jnp.float32),
            jax.ShapeDtypeStruct((N, K), jnp.float32),
        ),
        grid_spec=pltpu.PrefetchScalarGridSpec(
            num_scalar_prefetch=0,
            grid=(grid,),
            in_specs=[
                pl.BlockSpec((tile_n, C), lambda i: (i, 0)),      # X tile (streamed)
                pl.BlockSpec((C, Kd), lambda i: (0, 0)),          # Wt   (constant block)
                pl.BlockSpec((Kd, K), lambda i: (0, 0)),          # S    (constant block)
                pl.BlockSpec((K, Kd), lambda i: (0, 0)),          # S.T  (constant block)
            ],
            out_specs=[
                pl.BlockSpec((tile_n, Kd), lambda i: (i, 0)),     # mu tile (lane-dense)
                pl.BlockSpec((tile_n, K), lambda i: (i, 0)),      # rho tile (K wide)
            ],
        ),
        compiler_params=pltpu.CompilerParams(
            dimension_semantics=("parallel",),
            vmem_limit_bytes=32 * 1024 * 1024,
        ),
    )(X, Wt, S, St)

    # Row-major reshapes only; no slice copies.
    mu = mu_flat.reshape(N, K, d)
    rho = rho.reshape(N, K, 1)
    return mu, rho


def reference_forward(X, W, num_clusters, response_dim):
    emb = (X @ W.T).reshape(X.shape[0], num_clusters, response_dim)
    norms = jnp.linalg.norm(emb, axis=-1, keepdims=True)
    return emb / norms, norms / (norms + 1.0)


if __name__ == "__main__":
    # Small shapes consistent with the module (batch=8, covariates=16, d=32, K=4).
    N = 8
    num_covariates = 16
    response_dim = 32
    num_clusters = 4

    key = jax.random.PRNGKey(0)
    kx, kw = jax.random.split(key)
    X = jax.random.normal(kx, (N, num_covariates), dtype=jnp.float32)
    # Deterministic synthetic init of A.weight (shape (K*d, C) like nn.Linear).
    W = 0.1 * jax.random.normal(
        kw, (num_clusters * response_dim, num_covariates), dtype=jnp.float32)

    mu, rho = spherical_clustering_forward(
        X, W, num_clusters=num_clusters, response_dim=response_dim)
    mu, rho = jax.block_until_ready((mu, rho))

    mu_ref, rho_ref = reference_forward(X, W, num_clusters, response_dim)
    assert mu.shape == (N, num_clusters, response_dim)
    assert rho.shape == (N, num_clusters, 1)
    # 1e-4 tolerance accommodates rsqrt / selector-matmul reassociation vs the
    # sqrt + divide reference (values are O(1) unit vectors / concentrations).
    assert jnp.allclose(mu, mu_ref, atol=1e-4, rtol=1e-4)
    assert jnp.allclose(rho, rho_ref, atol=1e-4, rtol=1e-4)

    # TODO(synk): E_step/M_step/fit (EM loop, cluster dropping via self.mask) are
    # host-side training logic, not part of the forward kernel.

    print("KERNEL_OK")
</pallas_src>

<mosaic_0001>
module attributes {stable_mosaic.version = 11 : i64} {
  func.func @_spherical_kernel(%arg0: i32, %arg1: memref<8x16xf32, #tpu.memory_space<vmem>>, %arg2: memref<16x128xf32, #tpu.memory_space<vmem>>, %arg3: memref<128x4xf32, #tpu.memory_space<vmem>>, %arg4: memref<4x128xf32, #tpu.memory_space<vmem>>, %arg5: memref<8x128xf32, #tpu.memory_space<vmem>>, %arg6: memref<8x4xf32, #tpu.memory_space<vmem>>) attributes {dimension_semantics = [#tpu.dimension_semantics<parallel>], iteration_bounds = array<i64: 1>, scalar_prefetch = 0 : i64, scratch_operands = 0 : i64, tpu.core_type = #tpu.core_type<tc>, window_params = [{transform_indices = @transform_0, window_bounds = array<i64: 8, 16>}, {pipeline_mode = #tpu.pipeline_mode<synchronous>, transform_indices = @transform_1, window_bounds = array<i64: 16, 128>}, {pipeline_mode = #tpu.pipeline_mode<synchronous>, transform_indices = @transform_2, window_bounds = array<i64: 128, 4>}, {pipeline_mode = #tpu.pipeline_mode<synchronous>, transform_indices = @transform_3, window_bounds = array<i64: 4, 128>}, {transform_indices = @transform_4, window_bounds = array<i64: 8, 128>}, {transform_indices = @transform_5, window_bounds = array<i64: 8, 4>}]} {
    %c0 = arith.constant 0 : index
    %c0_0 = arith.constant 0 : index
    %0 = vector.load %arg1[%c0, %c0_0] : memref<8x16xf32, #tpu.memory_space<vmem>>, vector<8x16xf32>
    %c0_1 = arith.constant 0 : index
    %c0_2 = arith.constant 0 : index
    %1 = vector.load %arg2[%c0_1, %c0_2] : memref<16x128xf32, #tpu.memory_space<vmem>>, vector<16x128xf32>
    %cst = arith.constant dense<0.000000e+00> : vector<8x128xf32>
    %2 = tpu.matmul %0, %1, %cst {dimension_numbers = #tpu.dot_dimension_numbers<[1], [0], [0], [1], [0, 0, 1, 1], [], []>} : vector<8x16xf32>, vector<16x128xf32>, vector<8x128xf32> -> vector<8x128xf32>
    %3 = arith.mulf %2, %2 : vector<8x128xf32>
    %c0_3 = arith.constant 0 : index
    %c0_4 = arith.constant 0 : index
    %4 = vector.load %arg3[%c0_3, %c0_4] : memref<128x4xf32, #tpu.memory_space<vmem>>, vector<128x4xf32>
    %cst_5 = arith.constant dense<0.000000e+00> : vector<8x4xf32>
    %5 = tpu.matmul %3, %4, %cst_5 {dimension_numbers = #tpu.dot_dimension_numbers<[1], [0], [0], [1], [0, 0, 1, 1], [], []>} : vector<8x128xf32>, vector<128x4xf32>, vector<8x4xf32> -> vector<8x4xf32>
    %6 = math.sqrt %5 : vector<8x4xf32>
    %7 = math.rsqrt %5 : vector<8x4xf32>
    %cst_6 = arith.constant 1.000000e+00 : f32
    %8 = vector.broadcast %cst_6 : f32 to vector<8x4xf32>
    %9 = arith.addf %6, %8 : vector<8x4xf32>
    %10 = tpu.reciprocal %9 : vector<8x4xf32> -> vector<8x4xf32>
    %cst_7 = arith.constant 1.000000e+00 : f32
    %11 = vector.broadcast %cst_7 : f32 to vector<8x4xf32>
    %12 = arith.subf %11, %10 : vector<8x4xf32>
    %c0_8 = arith.constant 0 : index
    %c0_9 = arith.constant 0 : index
    %13 = vector.load %arg6[%c0_8, %c0_9] : memref<8x4xf32, #tpu.memory_space<vmem>>, vector<8x4xf32>
    tpu.vector_store %arg6[%c0_8, %c0_9], %12 {strides = array<i32>} : memref<8x4xf32, #tpu.memory_space<vmem>>, vector<8x4xf32>,
    %c0_10 = arith.constant 0 : index
    %c0_11 = arith.constant 0 : index
    %14 = vector.load %arg4[%c0_10, %c0_11] : memref<4x128xf32, #tpu.memory_space<vmem>>, vector<4x128xf32>
    %cst_12 = arith.constant dense<0.000000e+00> : vector<8x128xf32>
    %15 = tpu.matmul %7, %14, %cst_12 {dimension_numbers = #tpu.dot_dimension_numbers<[1], [0], [0], [1], [0, 0, 1, 1], [], []>} : vector<8x4xf32>, vector<4x128xf32>, vector<8x128xf32> -> vector<8x128xf32>
    %16 = arith.mulf %2, %15 : vector<8x128xf32>
    %c0_13 = arith.constant 0 : index
    %c0_14 = arith.constant 0 : index
    %17 = vector.load %arg5[%c0_13, %c0_14] : memref<8x128xf32, #tpu.memory_space<vmem>>, vector<8x128xf32>
    tpu.vector_store %arg5[%c0_13, %c0_14], %16 {strides = array<i32>} : memref<8x128xf32, #tpu.memory_space<vmem>>, vector<8x128xf32>,
    return
  }
  func.func @transform_0(%arg0: i32) -> (i32, i32) {
    %c0_i32 = arith.constant 0 : i32
    %c0_i32_0 = arith.constant 0 : i32
    return %arg0, %c0_i32 : i32, i32
  }
  func.func @transform_1(%arg0: i32) -> (i32, i32) {
    %c0_i32 = arith.constant 0 : i32
    %c0_i32_0 = arith.constant 0 : i32
    %c0_i32_1 = arith.constant 0 : i32
    return %c0_i32, %c0_i32_0 : i32, i32
  }
  func.func @transform_2(%arg0: i32) -> (i32, i32) {
    %c0_i32 = arith.constant 0 : i32
    %c0_i32_0 = arith.constant 0 : i32
    %c0_i32_1 = arith.constant 0 : i32
    return %c0_i32, %c0_i32_0 : i32, i32
  }
  func.func @transform_3(%arg0: i32) -> (i32, i32) {
    %c0_i32 = arith.constant 0 : i32
    %c0_i32_0 = arith.constant 0 : i32
    %c0_i32_1 = arith.constant 0 : i32
    return %c0_i32, %c0_i32_0 : i32, i32
  }
  func.func @transform_4(%arg0: i32) -> (i32, i32) {
    %c0_i32 = arith.constant 0 : i32
    %c0_i32_0 = arith.constant 0 : i32
    return %arg0, %c0_i32 : i32, i32
  }
  func.func @transform_5(%arg0: i32) -> (i32, i32) {
    %c0_i32 = arith.constant 0 : i32
    %c0_i32_0 = arith.constant 0 : i32
    return %arg0, %c0_i32 : i32, i32
  }
}

</mosaic_0001>

<llo_original>
// kernel: tpu_custom_call.1
$region0: #{tpu_custom_call.1}
  #allocation0 [shape = 'u32[]', space=smem, size = 0x4, offset = 0x4, fixed_abs, tag = 'smem constant byte address 0x4 - core index']
  #allocation1 [shape = 'u32[144,128]{1,0:T(1,128)}', space=vmem, size = 0x12000, scoped, tag = 'internal scratch']
  %s0 = inlined_call_operand.vmem [shape: f32[8,16], index: 0, kind: input, shape index: {}]
  %s1 = inlined_call_operand.vmem [shape: f32[16,128], index: 1, kind: input, shape index: {}]
  %s2 = inlined_call_operand.vmem [shape: f32[128,4], index: 2, kind: input, shape index: {}]
  %s3 = inlined_call_operand.vmem [shape: f32[4,128], index: 3, kind: input, shape index: {}]
  %s4 = inlined_call_operand.hbm [shape: f32[8,128], index: 4, kind: output, shape index: {0}]
  %s5 = inlined_call_operand.vmem [shape: f32[8,4], index: 5, kind: output, shape index: {1}]
  %6 = xla_tuple %s4, %s5
  %s7 = sld [smem:[#allocation0]]
  $region34: #{tpu_custom_call.1} parent=0
    _
  %s9 = ssub.s32 1, %s7
  %s10 = scalar_select 0, %s9, %s7
  $region1: #{tpu_custom_call.1} parent=0
    #allocation2 [shape = 'u8[4096]{0}', space=vmem, size = 0x1000, scoped, tag = 'output window, operand 0, single buffered']
    #allocation3 [shape = 's32[1]{0}', space=sflag, size = 0x4, scoped, tag = 'scoped memory for tpu_custom_call.1']
    %11 = vsyncpa [#allocation3], 0
    // Predicated region
    $region2: #{tpu_custom_call.1} parent=1 // pred_check
      _
    $region3: #{tpu_custom_call.1} parent=1 // pred_check_branch
      %13 = sbr.rel (0) target = $region5
    $region4: #{tpu_custom_call.1} parent=1 // pred_region
      _
    $region5: #{tpu_custom_call.1} parent=1 // pred_fallthru
      _
    // Predicated region
    $region6: #{tpu_custom_call.1} parent=1 // pred_check
      _
    $region7: #{tpu_custom_call.1} parent=1 // pred_check_branch
      %15 = sbr.rel (0) target = $region9
    $region8: #{tpu_custom_call.1} parent=1 // pred_region
      _
    $region9: #{tpu_custom_call.1} parent=1 // pred_fallthru
      _
    // Predicated region
    $region10: #{tpu_custom_call.1} parent=1 // pred_check
      _
    $region11: #{tpu_custom_call.1} parent=1 // pred_check_branch
      %17 = sbr.rel (0) target = $region13
    $region12: #{tpu_custom_call.1} parent=1 // pred_region
      _
    $region13: #{tpu_custom_call.1} parent=1 // pred_fallthru
      _
    // Predicated region
    $region14: #{tpu_custom_call.1} parent=1 // pred_check
      _
    $region15: #{tpu_custom_call.1} parent=1 // pred_check_branch
      %19 = sbr.rel (0) target = $region17
    $region16: #{tpu_custom_call.1} parent=1 // pred_region
      _
    $region17: #{tpu_custom_call.1} parent=1 // pred_fallthru
      _
    %v20 = vld [vmem:[%s0] sm:$0xff]
    %v21 = vld [vmem:[%s1] sm:$0xff]
    %v22 = vld [vmem:[%s1 + $0x8] sm:$0xff]
    %vm23 = vcmask 130048
    %v25 = vsel %vm23, %v20, 0
    %27 = vmatprep.subr.mxu0 0.0
    %28 = vmatpush1.msra.mxu0 %v21
    %29 = vmatprep.subr.mxu0 0.0
    %30 = vmatpush1.msra.mxu0 %v22
    %31 = vmatprep.subr.mxu0 0.0
    %32 = vmatpush1.msra.mxu0 0.0
    %33 = vmatprep.subr.mxu0 0.0
    %34 = vmatpush1.msra.mxu0 0.0
    %35 = vmatprep.subr.mxu0 0.0
    %36 = vmatpush1.msra.mxu0 0.0
    %37 = vmatprep.subr.mxu0 0.0
    %38 = vmatpush1.msra.mxu0 0.0
    %39 = vmatprep.subr.mxu0 0.0
    %40 = vmatpush1.msra.mxu0 0.0
    %41 = vmatprep.subr.mxu0 0.0
    %42 = vmatpush1.msra.mxu0 0.0
    %43 = vmatprep.subr.mxu0 0.0
    %44 = vmatpush1.msra.mxu0 0.0
    %45 = vmatprep.subr.mxu0 0.0
    %46 = vmatpush1.msra.mxu0 0.0
    %47 = vmatprep.subr.mxu0 0.0
    %48 = vmatpush1.msra.mxu0 0.0
    %49 = vmatprep.subr.mxu0 0.0
    %50 = vmatpush1.msra.mxu0 0.0
    %51 = vmatprep.subr.mxu0 0.0
    %52 = vmatpush1.msra.mxu0 0.0
    %53 = vmatprep.subr.mxu0 0.0
    %54 = vmatpush1.msra.mxu0 0.0
    %55 = vmatprep.subr.mxu0 0.0
    %56 = vmatpush1.msra.mxu0 0.0
    %57 = vmatprep.subr.mxu0 0.0
    %58 = vmatpush1.msra.mxu0 0.0
    %59 = vmatprep.subr.mxu0 0.0
    %60 = vmatpush1.msra.mxu0 0.0
    %61 = vmatprep.subr.mxu0 0.0
    %62 = vmatpush1.msra.mxu0 0.0
    %63 = vmatprep.subr.mxu0 0.0
    %64 = vmatpush1.msra.mxu0 0.0
    %65 = vmatprep.subr.mxu0 0.0
    %66 = vmatpush1.msra.mxu0 0.0
    %67 = vmatprep.subr.mxu0 0.0
    %68 = vmatpush1.msra.mxu0 0.0
    %69 = vmatprep.subr.mxu0 0.0
    %70 = vmatpush1.msra.mxu0 0.0
    %71 = vmatprep.subr.mxu0 0.0
    %72 = vmatpush1.msra.mxu0 0.0
    %73 = vmatprep.subr.mxu0 0.0
    %74 = vmatpush1.msra.mxu0 0.0
    %75 = vmatprep.subr.mxu0 0.0
    %76 = vmatpush1.msra.mxu0 0.0
    %77 = vmatprep.subr.mxu0 0.0
    %78 = vmatpush1.msra.mxu0 0.0
    %79 = vmatprep.subr.mxu0 0.0
    %80 = vmatpush1.msra.mxu0 0.0
    %81 = vmatprep.subr.mxu0 0.0
    %82 = vmatpush1.msra.mxu0 0.0
    %83 = vmatprep.subr.mxu0 0.0
    %84 = vmatpush1.msra.mxu0 0.0
    %85 = vmatprep.subr.mxu0 0.0
    %86 = vmatpush1.msra.mxu0 0.0
    %87 = vmatprep.subr.mxu0 0.0
    %88 = vmatpush1.msra.mxu0 0.0
    %89 = vmatprep.subr.mxu0 0.0
    %90 = vmatpush1.msra.mxu0 0.0
    %91 = vmatprep.mubr.f32.mxu0 0.0
    %92 = vmatmul.mubr.f32.gmra.mrb[0].mxu0 %v25
    %v93 = vpop.f32.mrb[0].mxu0
    %v94 = vadd.f32 0.0, %v93
    %v95 = vpop.f32.mrb[0].mxu0
    %96 = vdwg.mxu0
    %v97 = vmul.f32 %v94, %v94
    %v98 = vld [vmem:[%s2] sm:$0xff]
    %v99 = vld [vmem:[%s2 + $0x8] sm:$0xff]
    %v100 = vld [vmem:[%s2 + $0x10] sm:$0xff]
    %v101 = vld [vmem:[%s2 + $0x18] sm:$0xff]
    %v102 = vld [vmem:[%s2 + $0x20] sm:$0xff]
    %v103 = vld [vmem:[%s2 + $0x28] sm:$0xff]
    %v104 = vld [vmem:[%s2 + $0x30] sm:$0xff]
    %v105 = vld [vmem:[%s2 + $0x38] sm:$0xff]
    %v106 = vld [vmem:[%s2 + $0x40] sm:$0xff]
    %v107 = vld [vmem:[%s2 + $0x48] sm:$0xff]
    %v108 = vld [vmem:[%s2 + $0x50] sm:$0xff]
    %v109 = vld [vmem:[%s2 + $0x58] sm:$0xff]
    %v110 = vld [vmem:[%s2 + $0x60] sm:$0xff]
    %v111 = vld [vmem:[%s2 + $0x68] sm:$0xff]
    %v112 = vld [vmem:[%s2 + $0x70] sm:$0xff]
    %v113 = vld [vmem:[%s2 + $0x78] sm:$0xff]
    %114 = vmatprep.subr.mxu0 0.0
    %115 = vmatpush1.msra.mxu0 %v98
    %116 = vmatprep.subr.mxu0 0.0
    %117 = vmatpush1.msra.mxu0 %v99
    %118 = vmatprep.subr.mxu0 0.0
    %119 = vmatpush1.msra.mxu0 %v100
    %120 = vmatprep.subr.mxu0 0.0
    %121 = vmatpush1.msra.mxu0 %v101
    %122 = vmatprep.subr.mxu0 0.0
    %123 = vmatpush1.msra.mxu0 %v102
    %124 = vmatprep.subr.mxu0 0.0
    %125 = vmatpush1.msra.mxu0 %v103
    %126 = vmatprep.subr.mxu0 0.0
    %127 = vmatpush1.msra.mxu0 %v104
    %128 = vmatprep.subr.mxu0 0.0
    %129 = vmatpush1.msra.mxu0 %v105
    %130 = vmatprep.subr.mxu0 0.0
    %131 = vmatpush1.msra.mxu0 %v106
    %132 = vmatprep.subr.mxu0 0.0
    %133 = vmatpush1.msra.mxu0 %v107
    %134 = vmatprep.subr.mxu0 0.0
    %135 = vmatpush1.msra.mxu0 %v108
    %136 = vmatprep.subr.mxu0 0.0
    %137 = vmatpush1.msra.mxu0 %v109
    %138 = vmatprep.subr.mxu0 0.0
    %139 = vmatpush1.msra.mxu0 %v110
    %140 = vmatprep.subr.mxu0 0.0
    %141 = vmatpush1.msra.mxu0 %v111
    %142 = vmatprep.subr.mxu0 0.0
    %143 = vmatpush1.msra.mxu0 %v112
    %144 = vmatprep.subr.mxu0 0.0
    %145 = vmatpush1.msra.mxu0 %v113
    %146 = vmatprep.subr.mxu0 0.0
    %147 = vmatpush1.msra.mxu0 0.0
    %148 = vmatprep.subr.mxu0 0.0
    %149 = vmatpush1.msra.mxu0 0.0
    %150 = vmatprep.subr.mxu0 0.0
    %151 = vmatpush1.msra.mxu0 0.0
    %152 = vmatprep.subr.mxu0 0.0
    %153 = vmatpush1.msra.mxu0 0.0
    %154 = vmatprep.subr.mxu0 0.0
    %155 = vmatpush1.msra.mxu0 0.0
    %156 = vmatprep.subr.mxu0 0.0
    %157 = vmatpush1.msra.mxu0 0.0
    %158 = vmatprep.subr.mxu0 0.0
    %159 = vmatpush1.msra.mxu0 0.0
    %160 = vmatprep.subr.mxu0 0.0
    %161 = vmatpush1.msra.mxu0 0.0
    %162 = vmatprep.subr.mxu0 0.0
    %163 = vmatpush1.msra.mxu0 0.0
    %164 = vmatprep.subr.mxu0 0.0
    %165 = vmatpush1.msra.mxu0 0.0
    %166 = vmatprep.subr.mxu0 0.0
    %167 = vmatpush1.msra.mxu0 0.0
    %168 = vmatprep.subr.mxu0 0.0
    %169 = vmatpush1.msra.mxu0 0.0
    %170 = vmatprep.subr.mxu0 0.0
    %171 = vmatpush1.msra.mxu0 0.0
    %172 = vmatprep.subr.mxu0 0.0
    %173 = vmatpush1.msra.mxu0 0.0
    %174 = vmatprep.subr.mxu0 0.0
    %175 = vmatpush1.msra.mxu0 0.0
    %176 = vmatprep.subr.mxu0 0.0
    %177 = vmatpush1.msra.mxu0 0.0
    %178 = vmatprep.mubr.f32.mxu0 0.0
    %179 = vmatmul.mubr.f32.gmra.mrb[0].mxu0 %v97
    %v180 = vpop.f32.mrb[0].mxu0
    %v181 = vadd.f32 0.0, %v180
    %v182 = vpop.f32.mrb[0].mxu0
    %183 = vdwg.mxu0
    %v184 = vrsqrt.pop %v181
    %v185 = vmul.f32 %v181, %v184
    %vm186 = vcmp.eq.f32.partialorder %v181, inf
    %v187 = vsel %vm186, %v181, %v185
    %vm188 = vcmp.eq.f32.partialorder %v181, 0.0
    %v189 = vand.u32 %v181, 2147483648
    %v190 = vsel %vm188, %v189, %v187
    %v191 = vrsqrt.pop %v181
    %v192 = vadd.f32 %v190, 1.0
    %v193 = vrcp.pop %v192
    %v194 = vsub.f32 1.0, %v193
    %vm195 = vcmask 31744
    %196 = vst.msk [vmem:[%s5] sm:$0xff] %vm195, %v194
    %v197 = vld [vmem:[%s3] sm:$0xf]
    %v199 = vsel %vm195, %v191, 0
    %vm201 = vcmask 1043456
    %v203 = vsel %vm201, %v197, 0
    %205 = vmatprep.subr.mxu0 0.0
    %206 = vmatpush1.msra.mxu0 %v203
    %207 = vmatprep.subr.mxu0 0.0
    %208 = vmatpush1.msra.mxu0 0.0
    %209 = vmatprep.subr.mxu0 0.0
    %210 = vmatpush1.msra.mxu0 0.0
    %211 = vmatprep.subr.mxu0 0.0
    %212 = vmatpush1.msra.mxu0 0.0
    %213 = vmatprep.subr.mxu0 0.0
    %214 = vmatpush1.msra.mxu0 0.0
    %215 = vmatprep.subr.mxu0 0.0
    %216 = vmatpush1.msra.mxu0 0.0
    %217 = vmatprep.subr.mxu0 0.0
    %218 = vmatpush1.msra.mxu0 0.0
    %219 = vmatprep.subr.mxu0 0.0
    %220 = vmatpush1.msra.mxu0 0.0
    %221 = vmatprep.subr.mxu0 0.0
    %222 = vmatpush1.msra.mxu0 0.0
    %223 = vmatprep.subr.mxu0 0.0
    %224 = vmatpush1.msra.mxu0 0.0
    %225 = vmatprep.subr.mxu0 0.0
    %226 = vmatpush1.msra.mxu0 0.0
    %227 = vmatprep.subr.mxu0 0.0
    %228 = vmatpush1.msra.mxu0 0.0
    %229 = vmatprep.subr.mxu0 0.0
    %230 = vmatpush1.msra.mxu0 0.0
    %231 = vmatprep.subr.mxu0 0.0
    %232 = vmatpush1.msra.mxu0 0.0
    %233 = vmatprep.subr.mxu0 0.0
    %234 = vmatpush1.msra.mxu0 0.0
    %235 = vmatprep.subr.mxu0 0.0
    %236 = vmatpush1.msra.mxu0 0.0
    %237 = vmatprep.subr.mxu0 0.0
    %238 = vmatpush1.msra.mxu0 0.0
    %239 = vmatprep.subr.mxu0 0.0
    %240 = vmatpush1.msra.mxu0 0.0
    %241 = vmatprep.subr.mxu0 0.0
    %242 = vmatpush1.msra.mxu0 0.0
    %243 = vmatprep.subr.mxu0 0.0
    %244 = vmatpush1.msra.mxu0 0.0
    %245 = vmatprep.subr.mxu0 0.0
    %246 = vmatpush1.msra.mxu0 0.0
    %247 = vmatprep.subr.mxu0 0.0
    %248 = vmatpush1.msra.mxu0 0.0
    %249 = vmatprep.subr.mxu0 0.0
    %250 = vmatpush1.msra.mxu0 0.0
    %251 = vmatprep.subr.mxu0 0.0
    %252 = vmatpush1.msra.mxu0 0.0
    %253 = vmatprep.subr.mxu0 0.0
    %254 = vmatpush1.msra.mxu0 0.0
    %255 = vmatprep.subr.mxu0 0.0
    %256 = vmatpush1.msra.mxu0 0.0
    %257 = vmatprep.subr.mxu0 0.0
    %258 = vmatpush1.msra.mxu0 0.0
    %259 = vmatprep.subr.mxu0 0.0
    %260 = vmatpush1.msra.mxu0 0.0
    %261 = vmatprep.subr.mxu0 0.0
    %262 = vmatpush1.msra.mxu0 0.0
    %263 = vmatprep.subr.mxu0 0.0
    %264 = vmatpush1.msra.mxu0 0.0
    %265 = vmatprep.subr.mxu0 0.0
    %266 = vmatpush1.msra.mxu0 0.0
    %267 = vmatprep.subr.mxu0 0.0
    %268 = vmatpush1.msra.mxu0 0.0
    %269 = vmatprep.mubr.f32.mxu0 0.0
    %270 = vmatmul.mubr.f32.gmra.mrb[0].mxu0 %v199
    %v271 = vpop.f32.mrb[0].mxu0
    %v272 = vadd.f32 0.0, %v271
    %v273 = vpop.f32.mrb[0].mxu0
    %274 = vdwg.mxu0
    %v275 = vmul.f32 %v94, %v272
    %276 = vst [vmem:[#allocation2] sm:$0xff] %v275
    // Predicated region
    $region18: #{tpu_custom_call.1} parent=1 // pred_check
      _
    $region19: #{tpu_custom_call.1} parent=1 // pred_check_branch
      %278 = sbr.rel (0) target = $region21
    $region20: #{tpu_custom_call.1} parent=1 // pred_region
      %s280 = ssub.s32 128, 128
      %281 = vsyncadd [#allocation3], %s280
      %s283 = sshll.u32 [#allocation2], 4
      %s284 = int_to_ptr.vmem [resolvable:$true] %s283
      %286 = dma.vmem_to_hbm [thread:$0]  %s284, 128, %s4, [#allocation3]
    $region21: #{tpu_custom_call.1} parent=1 // pred_fallthru
      _
    // Predicated region
    $region22: #{tpu_custom_call.1} parent=1 // pred_check
      _
    $region23: #{tpu_custom_call.1} parent=1 // pred_check_branch
      %288 = sbr.rel (0) target = $region25
    $region24: #{tpu_custom_call.1} parent=1 // pred_region
      _
    $region25: #{tpu_custom_call.1} parent=1 // pred_fallthru
      _
    // Predicated region
    $region26: #{tpu_custom_call.1} parent=1 // pred_check
      _
    $region27: #{tpu_custom_call.1} parent=1 // pred_check_branch
      %290 = sbr.rel (0) target = $region29
    $region28: #{tpu_custom_call.1} parent=1 // pred_region
      %291 = dma.done [#allocation3], 128
    $region29: #{tpu_custom_call.1} parent=1 // pred_fallthru
      _
    // Predicated region
    $region30: #{tpu_custom_call.1} parent=1 // pred_check
      _
    $region31: #{tpu_custom_call.1} parent=1 // pred_check_branch
      %293 = sbr.rel (0) target = $region33
    $region32: #{tpu_custom_call.1} parent=1 // pred_region
      _
    $region33: #{tpu_custom_call.1} parent=1 // pred_fallthru
      _
    %294 = vsyncpa [#allocation3], 1

</llo_original>
